<compile_context>
chip_gen: v7x
topology: tpu7x:2x2x1
jax: 0.10.0
libtpu: 0.0.40
codegen_flags: <defaults>
</compile_context>

<pallas_src>
import functools

import numpy as np
import jax
import jax.numpy as jnp
from jax import lax
from jax.experimental import pallas as pl
from jax.experimental.pallas import tpu as pltpu

FEA_DIM = 3                  # raw point feature dim (fea_dim)
K_PAD = 8                    # first Linear K padded 3 -> 8 (zero rows, MXU friendly)
OUT_PT_FEA_DIM = 64          # out_pt_fea_dim (== pool_dim, fea_compre=None)
MAX_PT = 4                   # max_pt_per_encode (small for the demo)
GRID_SIZE = (16, 16)         # grid_size
BN_EPS = 1e-5
TILE_P = 512                 # point tile (sweep 512-1024; keep >=2 steps on v7x)
TILE_V = 256                 # voxel tile for the vectorized per-voxel max
VCHUNK = 256                 # voxels DMA'd per double-buffered chunk in the scatter
VMEM_LIMIT = 32 * 1024 * 1024


# ----------------------------- Pallas kernels ------------------------------

def pn_layer_kernel(p_ref, z_ref, s_ref, t_ref, w_ref, b_ref,
                    o_ref, sum_ref, ssq_ref, *, apply_act):
    """Folded BN affine (+ ReLU) -> matmul (+ bias).  Also emits masked first /
    second moments of the OUTPUT so the next layer's training-mode BatchNorm
    never has to re-read the full activation from HBM."""
    a = z_ref[...] * s_ref[...] + t_ref[...]
    if apply_act:
        a = jnp.maximum(a, 0.0)
    out = jnp.dot(a.astype(w_ref.dtype), w_ref[...],
                  preferred_element_type=jnp.float32) + b_ref[...]
    o_ref[...] = out

    tile = o_ref.shape[0]
    rows = pl.program_id(0) * tile + lax.broadcasted_iota(jnp.int32, (tile, 1), 0)
    valid = (rows < p_ref[0]).astype(jnp.float32)
    m = out * valid
    sum_ref[...] = jnp.sum(m, axis=0, keepdims=True)
    ssq_ref[...] = jnp.sum(m * out, axis=0, keepdims=True)


def pn_layer_apply(z, scale, shift, w, b, p_valid, tile_p, *, apply_act):
    p_pad, cin = z.shape
    cout = w.shape[1]
    ntiles = p_pad // tile_p
    kernel = functools.partial(pn_layer_kernel, apply_act=apply_act)
    return pl.pallas_call(
        kernel,
        out_shape=(jax.ShapeDtypeStruct((p_pad, cout), jnp.float32),
                   jax.ShapeDtypeStruct((ntiles, 1, cout), jnp.float32),
                   jax.ShapeDtypeStruct((ntiles, 1, cout), jnp.float32)),
        grid_spec=pltpu.PrefetchScalarGridSpec(
            num_scalar_prefetch=1,
            grid=(ntiles,),
            in_specs=[pl.BlockSpec((tile_p, cin), lambda i, p: (i, 0)),
                      pl.BlockSpec((1, cin), lambda i, p: (0, 0)),      # resident
                      pl.BlockSpec((1, cin), lambda i, p: (0, 0)),      # resident
                      pl.BlockSpec((cin, cout), lambda i, p: (0, 0)),   # resident
                      pl.BlockSpec((1, cout), lambda i, p: (0, 0))],    # resident
            out_specs=[pl.BlockSpec((tile_p, cout), lambda i, p: (i, 0)),
                       pl.BlockSpec((None, 1, cout), lambda i, p: (i, 0, 0)),
                       pl.BlockSpec((None, 1, cout), lambda i, p: (i, 0, 0))]),
        compiler_params=pltpu.CompilerParams(
            dimension_semantics=("parallel",),
            vmem_limit_bytes=VMEM_LIMIT),
    )(jnp.asarray([p_valid], jnp.int32), z, scale, shift, w, b)


def voxel_max_kernel(x_ref, o_ref):
    # vectorized per-voxel max over the MAX_PT leading axis (pure VPU, no loop)
    o_ref[...] = jnp.max(x_ref[...], axis=0)


def voxel_max(padded_t):
    mp, v_pad, c = padded_t.shape
    return pl.pallas_call(
        voxel_max_kernel,
        out_shape=jax.ShapeDtypeStruct((v_pad, c), jnp.float32),
        grid=(v_pad // TILE_V,),
        in_specs=[pl.BlockSpec((mp, TILE_V, c), lambda i: (0, i, 0))],
        out_specs=pl.BlockSpec((TILE_V, c), lambda i: (i, 0)),
        compiler_params=pltpu.CompilerParams(
            dimension_semantics=("parallel",),
            vmem_limit_bytes=VMEM_LIMIT),
    )(padded_t)


def bev_scatter_pool_kernel(bounds_ref, hs_ref, ws_ref, pooled_hbm,
                            o_ref, buf, sem, grid_ref):
    # Per batch: zero-init BEV plane (-inf 1-px border = MaxPool2d padding),
    # stream this batch's pooled voxel rows from HBM in double-buffered chunks,
    # scatter each row with a direct dynamic store, then separable 3x3 max pool.
    b = pl.program_id(0)
    hp, wp, _ = grid_ref.shape
    h_out, w_out = hp - 2, wp - 2

    hh = lax.broadcasted_iota(jnp.int32, (hp, wp, 1), 0)
    ww = lax.broadcasted_iota(jnp.int32, (hp, wp, 1), 1)
    interior = (hh >= 1) & (hh <= h_out) & (ww >= 1) & (ww <= w_out)
    grid_ref[...] = jnp.broadcast_to(
        jnp.where(interior, jnp.float32(0.0), jnp.float32(-jnp.inf)),
        grid_ref.shape)

    v0 = bounds_ref[b]
    v1 = bounds_ref[b + 1]
    n_chunks = (v1 - v0 + (VCHUNK - 1)) // VCHUNK

    def start_fetch(cidx, slot):
        pltpu.make_async_copy(
            pooled_hbm.at[pl.ds(v0 + cidx * VCHUNK, VCHUNK), :],
            buf.at[slot], sem.at[slot]).start()

    @pl.when(n_chunks > 0)
    def _():
        start_fetch(0, 0)

    def chunk_body(cidx, carry):
        slot = cidx & 1
        pltpu.make_async_copy(pooled_hbm.at[pl.ds(0, VCHUNK), :],
                              buf.at[slot], sem.at[slot]).wait()

        @pl.when(cidx + 1 < n_chunks)
        def _():
            start_fetch(cidx + 1, 1 - slot)     # prefetch next chunk while scattering

        base = v0 + cidx * VCHUNK
        n_valid = jnp.minimum(VCHUNK, v1 - base)

        def scatter_one(i, c2):
            v = base + i
            h = hs_ref[v]
            w = ws_ref[v]
            grid_ref[h, pl.ds(w, 1), :] = buf[slot, pl.ds(i, 1), :]
            return c2

        lax.fori_loop(0, n_valid, scatter_one, 0)
        return carry

    lax.fori_loop(0, n_chunks, chunk_body, 0)

    # separable 3x3 / stride-1 max pool: row max then col max (4 shifted reads)
    g = grid_ref[...]
    rowm = jnp.maximum(jnp.maximum(g[0:h_out, :, :], g[1:h_out + 1, :, :]),
                       g[2:h_out + 2, :, :])
    o_ref[...] = jnp.maximum(
        jnp.maximum(rowm[:, 0:w_out, :], rowm[:, 1:w_out + 1, :]),
        rowm[:, 2:w_out + 2, :])


def bev_scatter_pool(pooled, bounds, hs, ws, batch):
    gh, gw = GRID_SIZE
    c = pooled.shape[1]
    return pl.pallas_call(
        bev_scatter_pool_kernel,
        out_shape=jax.ShapeDtypeStruct((batch, gh, gw, c), jnp.float32),
        grid_spec=pltpu.PrefetchScalarGridSpec(
            num_scalar_prefetch=3,
            grid=(batch,),
            in_specs=[pl.BlockSpec(memory_space=pl.ANY)],   # stays in HBM, chunk DMA
            out_specs=pl.BlockSpec((None, gh, gw, c),
                                   lambda b, bnd, hh, ww: (b, 0, 0, 0)),
            scratch_shapes=[pltpu.VMEM((2, VCHUNK, c), jnp.float32),
                            pltpu.SemaphoreType.DMA((2,)),
                            pltpu.VMEM((gh + 2, gw + 2, c), jnp.float32)]),
        compiler_params=pltpu.CompilerParams(
            dimension_semantics=("parallel",),
            vmem_limit_bytes=VMEM_LIMIT),
    )(bounds, hs, ws, pooled)


# --------------------------- parameter init (glue) --------------------------

def init_pointnet_params(key):
    """Deterministic init of the 4 Linear layers (BN uses default gamma=1, beta=0)."""
    dims = [(FEA_DIM, 64), (64, 128), (128, 256), (256, OUT_PT_FEA_DIM)]
    params = []
    for i, (fin, fout) in enumerate(dims):
        kw, kb = jax.random.split(jax.random.fold_in(key, i))
        bound = 1.0 / np.sqrt(fin)
        w = jax.random.uniform(kw, (fin, fout), jnp.float32, -bound, bound)
        b = jax.random.uniform(kb, (1, fout), jnp.float32, -bound, bound)
        params.append((w, b))
    return params


# ------------------------ PointNet (BN folded, tiled) ------------------------

def _affine_from_moments(sums, ssqs, p_valid):
    """Training-mode BatchNorm1d affine from per-tile masked moments."""
    s = jnp.sum(sums, axis=(0, 1))
    q = jnp.sum(ssqs, axis=(0, 1))
    mu = s / p_valid
    var = jnp.maximum(q / p_valid - mu * mu, 0.0)
    scale = lax.rsqrt(var + BN_EPS)
    return scale[None, :], (-mu * scale)[None, :]


def pointnet_forward(x_pad, p_valid, tile_p, params):
    (w1, b1), (w2, b2), (w3, b3), (w4, b4) = params

    # BN0 folded directly into the K-padded first Linear (exact: gamma=1, beta=0)
    xv = x_pad[:p_valid, :FEA_DIM]
    mu0 = jnp.mean(xv, axis=0)
    var0 = jnp.mean((xv - mu0) ** 2, axis=0)
    s0 = lax.rsqrt(var0 + BN_EPS)
    t0 = -mu0 * s0
    w1f = jnp.concatenate(
        [w1 * s0[:, None],
         jnp.zeros((K_PAD - FEA_DIM, w1.shape[1]), jnp.float32)], axis=0)
    b1f = b1 + t0[None, :] @ w1

    one8 = jnp.ones((1, K_PAD), jnp.float32)
    zero8 = jnp.zeros((1, K_PAD), jnp.float32)
    z1, m1, q1 = pn_layer_apply(x_pad, one8, zero8, w1f, b1f, p_valid, tile_p,
                                apply_act=False)                        # [P, 64]
    s1, t1 = _affine_from_moments(m1, q1, p_valid)
    z2, m2, q2 = pn_layer_apply(z1, s1, t1, w2.astype(jnp.bfloat16), b2,
                                p_valid, tile_p, apply_act=True)        # [P, 128]
    s2, t2 = _affine_from_moments(m2, q2, p_valid)
    z3, m3, q3 = pn_layer_apply(z2, s2, t2, w3.astype(jnp.bfloat16), b3,
                                p_valid, tile_p, apply_act=True)        # [P, 256]
    s3, t3 = _affine_from_moments(m3, q3, p_valid)
    z4, _, _ = pn_layer_apply(z3, s3, t3, w4.astype(jnp.bfloat16), b4,
                              p_valid, tile_p, apply_act=True)          # [P, 64]
    return z4


# ----------------- host-side preprocessing (numpy glue) ---------------------

def greedy_fps(xyz, K):
    """Pure-numpy port of nb_greedy_FPS (numba jit in the original)."""
    n = xyz.shape[0]
    sum_vec = (xyz ** 2).sum(axis=1, keepdims=True)
    pd = sum_vec + sum_vec.T - 2.0 * xyz @ xyz.T
    cand = np.zeros(n, dtype=bool); cand[0] = True
    remain = np.ones(n, dtype=bool); remain[0] = False
    all_ind = np.arange(n)
    for i in range(1, K):
        if i == 1:
            mrd = pd[:, 0][remain]
        else:
            mrd = pd[remain][:, cand].min(axis=1)
        nxt = all_ind[remain][int(np.argmax(mrd))]
        cand[nxt] = True
        remain[nxt] = False
    return cand


def pt_bev_forward(pt_fea_list, xy_ind_list, params):
    # ----- data-dependent preprocessing: no clean Pallas equivalent ----------
    B = len(pt_fea_list)
    gh, gw = GRID_SIZE
    cat_fea = np.concatenate([np.asarray(f) for f in pt_fea_list],
                             axis=0).astype(np.float32)
    cat_ind = np.concatenate(
        [np.pad(np.asarray(ind), ((0, 0), (1, 0)), constant_values=i)
         for i, ind in enumerate(xy_ind_list)], axis=0).astype(np.int64)
    pt_num = cat_ind.shape[0]
    perm = np.random.RandomState(0).permutation(pt_num)  # torch.randperm analogue
    cat_fea, cat_ind = cat_fea[perm], cat_ind[perm]

    unq, unq_inv, unq_cnt = np.unique(cat_ind, return_inverse=True,
                                      return_counts=True, axis=0)
    unq_inv = unq_inv.reshape(-1)

    # farthest-point selection per voxel (inline instead of a multiprocessing pool)
    unq_ind = np.split(np.argsort(unq_inv, kind='stable'),
                       np.cumsum(unq_cnt[:-1]))
    remain_ind = np.zeros((pt_num,), dtype=bool)
    np_xyz = cat_fea[:, :3]
    for i_inds in unq_ind:
        if len(i_inds) <= MAX_PT:
            remain_ind[i_inds] = True
        else:
            sel = greedy_fps(np_xyz[i_inds, :].astype(np.float32), MAX_PT)
            remain_ind[i_inds[sel]] = True

    cat_fea = cat_fea[remain_ind]
    sel_inv = unq_inv[remain_ind].astype(np.int64)
    num_vox = int(unq.shape[0])

    # sort surviving points by voxel id -> each voxel's rows are contiguous
    order = np.argsort(sel_inv, kind='stable')
    cat_fea, sel_inv = cat_fea[order], sel_inv[order]
    P = cat_fea.shape[0]
    cnt = np.bincount(sel_inv, minlength=num_vox)             # 1..MAX_PT per voxel
    starts = np.concatenate(([0], np.cumsum(cnt)[:-1]))

    # voxel count padded for the V-tiled max kernel + one extra chunk of DMA slack
    v_pad = (int(np.ceil(num_vox / VCHUNK)) + 1) * VCHUNK
    cnt_p = np.zeros(v_pad, np.int64); cnt_p[:num_vox] = cnt
    starts_p = np.zeros(v_pad, np.int64); starts_p[:num_vox] = starts
    rr = np.arange(MAX_PT)
    gather_idx = (starts_p[None, :] +
                  np.minimum(rr[:, None], np.maximum(cnt_p - 1, 0)[None, :])
                  ).astype(np.int32)                          # [MAX_PT, v_pad]
    slot_valid = rr[:, None] < cnt_p[None, :]                 # [MAX_PT, v_pad]

    # per-batch voxel ranges (unq is lexicographically sorted) + clamped BEV coords
    bounds = np.searchsorted(unq[:, 0], np.arange(B + 1)).astype(np.int32)
    hs = np.ones(v_pad, np.int32)
    ws = np.ones(v_pad, np.int32)
    hs[:num_vox] = np.clip(unq[:, 1], 0, gh - 1) + 1   # host clamp: VMEM stores have
    ws[:num_vox] = np.clip(unq[:, 2], 0, gw - 1) + 1   #   no runtime OOB check

    # point tile: 512 in production, shrink (multiple of 8) for tiny demo clouds
    tile_p = TILE_P if P >= TILE_P else max(8, int(np.ceil(P / 8)) * 8)
    p_pad = int(np.ceil(P / tile_p)) * tile_p
    x_pad = np.zeros((p_pad, K_PAD), np.float32)
    x_pad[:P, :FEA_DIM] = cat_fea[:, :FEA_DIM]

    # ------------------------------ Pallas path ------------------------------
    processed = pointnet_forward(jnp.asarray(x_pad), P, tile_p, params)  # [P_pad,64]

    # segmented layout [MAX_PT, V_pad, C] (invalid slots = -inf) -> per-voxel max
    padded_t = jnp.where(jnp.asarray(slot_valid)[:, :, None],
                         processed[jnp.asarray(gather_idx)], -jnp.inf)
    pooled = voxel_max(padded_t)                                         # [V_pad,64]

    out_nhwc = bev_scatter_pool(pooled, jnp.asarray(bounds),
                                jnp.asarray(hs), jnp.asarray(ws), B)
    out_nchw = jnp.transpose(out_nhwc, (0, 3, 1, 2))  # permute(0,3,1,2)
    # TODO(synk): BEV_net is an externally injected submodule; identity used here.
    return out_nchw


# ---------------------------------- main ------------------------------------

if __name__ == "__main__":
    key = jax.random.PRNGKey(0)
    k_fea, k_ind, k_par = jax.random.split(key, 3)

    B, N = 2, 40
    pt_fea = [np.asarray(jax.random.normal(jax.random.fold_in(k_fea, b),
                                           (N, FEA_DIM), jnp.float32))
              for b in range(B)]
    xy_ind = [np.asarray(jax.random.randint(jax.random.fold_in(k_ind, b),
                                            (N, 2), 0, GRID_SIZE[0]))
              for b in range(B)]
    params = init_pointnet_params(k_par)

    out = pt_bev_forward(pt_fea, xy_ind, params)
    jax.block_until_ready(out)
    assert out.shape == (B, OUT_PT_FEA_DIM, GRID_SIZE[0], GRID_SIZE[1])
    assert bool(jnp.all(jnp.isfinite(out)))
    print("KERNEL_OK")
</pallas_src>

<mosaic_0001>
module attributes {stable_mosaic.version = 11 : i64} {
  func.func @pn_layer_kernel(%arg0: i32, %arg1: memref<1xi32, #tpu.memory_space<smem>>, %arg2: memref<80x8xf32, #tpu.memory_space<vmem>>, %arg3: memref<1x8xf32, #tpu.memory_space<vmem>>, %arg4: memref<1x8xf32, #tpu.memory_space<vmem>>, %arg5: memref<8x64xf32, #tpu.memory_space<vmem>>, %arg6: memref<1x64xf32, #tpu.memory_space<vmem>>, %arg7: memref<80x64xf32, #tpu.memory_space<vmem>>, %arg8: memref<1x1x64xf32, #tpu.memory_space<vmem>>, %arg9: memref<1x1x64xf32, #tpu.memory_space<vmem>>) attributes {dimension_semantics = [#tpu.dimension_semantics<parallel>], iteration_bounds = array<i64: 1>, scalar_prefetch = 1 : i64, scratch_operands = 0 : i64, tpu.core_type = #tpu.core_type<tc>, window_params = [{transform_indices = @transform_0, window_bounds = array<i64: 80, 8>}, {pipeline_mode = #tpu.pipeline_mode<synchronous>, transform_indices = @transform_1, window_bounds = array<i64: 1, 8>}, {pipeline_mode = #tpu.pipeline_mode<synchronous>, transform_indices = @transform_2, window_bounds = array<i64: 1, 8>}, {pipeline_mode = #tpu.pipeline_mode<synchronous>, transform_indices = @transform_3, window_bounds = array<i64: 8, 64>}, {pipeline_mode = #tpu.pipeline_mode<synchronous>, transform_indices = @transform_4, window_bounds = array<i64: 1, 64>}, {transform_indices = @transform_5, window_bounds = array<i64: 80, 64>}, {transform_indices = @transform_6, window_bounds = array<i64: 1, 1, 64>}, {transform_indices = @transform_7, window_bounds = array<i64: 1, 1, 64>}]} {
    %c0 = arith.constant 0 : index
    %c0_0 = arith.constant 0 : index
    %0 = vector.load %arg2[%c0, %c0_0] : memref<80x8xf32, #tpu.memory_space<vmem>>, vector<80x8xf32>
    %c0_1 = arith.constant 0 : index
    %c0_2 = arith.constant 0 : index
    %1 = vector.load %arg3[%c0_1, %c0_2] : memref<1x8xf32, #tpu.memory_space<vmem>>, vector<1x8xf32>
    %2 = vector.broadcast %1 : vector<1x8xf32> to vector<80x8xf32>
    %3 = arith.mulf %0, %2 : vector<80x8xf32>
    %c0_3 = arith.constant 0 : index
    %c0_4 = arith.constant 0 : index
    %4 = vector.load %arg4[%c0_3, %c0_4] : memref<1x8xf32, #tpu.memory_space<vmem>>, vector<1x8xf32>
    %5 = vector.broadcast %4 : vector<1x8xf32> to vector<80x8xf32>
    %6 = arith.addf %3, %5 : vector<80x8xf32>
    %c0_5 = arith.constant 0 : index
    %c0_6 = arith.constant 0 : index
    %7 = vector.load %arg5[%c0_5, %c0_6] : memref<8x64xf32, #tpu.memory_space<vmem>>, vector<8x64xf32>
    %cst = arith.constant dense<0.000000e+00> : vector<80x64xf32>
    %8 = tpu.matmul %6, %7, %cst {dimension_numbers = #tpu.dot_dimension_numbers<[1], [0], [0], [1], [0, 0, 1, 1], [], []>} : vector<80x8xf32>, vector<8x64xf32>, vector<80x64xf32> -> vector<80x64xf32>
    %c0_7 = arith.constant 0 : index
    %c0_8 = arith.constant 0 : index
    %9 = vector.load %arg6[%c0_7, %c0_8] : memref<1x64xf32, #tpu.memory_space<vmem>>, vector<1x64xf32>
    %10 = vector.broadcast %9 : vector<1x64xf32> to vector<80x64xf32>
    %11 = arith.addf %8, %10 : vector<80x64xf32>
    %c0_9 = arith.constant 0 : index
    %c0_10 = arith.constant 0 : index
    %12 = vector.load %arg7[%c0_9, %c0_10] : memref<80x64xf32, #tpu.memory_space<vmem>>, vector<80x64xf32>
    tpu.vector_store %arg7[%c0_9, %c0_10], %11 {strides = array<i32>} : memref<80x64xf32, #tpu.memory_space<vmem>>, vector<80x64xf32>,
    %c80_i32 = arith.constant 80 : i32
    %13 = arith.muli %arg0, %c80_i32 : i32
    %14 = tpu.iota {dimensions = array<i32: 0>} : vector<80x1xi32>
    %15 = vector.broadcast %13 : i32 to vector<80x1xi32>
    %16 = arith.addi %15, %14 : vector<80x1xi32>
    %c0_11 = arith.constant 0 : index
    %17 = memref.load %arg1[%c0_11] : memref<1xi32, #tpu.memory_space<smem>>
    %18 = vector.broadcast %17 : i32 to vector<80x1xi32>
    %19 = arith.cmpi slt, %16, %18 : vector<80x1xi32>
    %20 = arith.extui %19 : vector<80x1xi1> to vector<80x1xi32>
    %21 = arith.sitofp %20 : vector<80x1xi32> to vector<80x1xf32>
    %22 = vector.broadcast %21 : vector<80x1xf32> to vector<80x64xf32>
    %23 = arith.mulf %11, %22 : vector<80x64xf32>
    %cst_12 = arith.constant dense<0.000000e+00> : vector<64xf32>
    %24 = vector.multi_reduction <add>, %23, %cst_12 [0] : vector<80x64xf32> to vector<64xf32>
    %25 = vector.shape_cast %24 : vector<64xf32> to vector<1x64xf32>
    %c0_13 = arith.constant 0 : index
    %c0_14 = arith.constant 0 : index
    %c0_15 = arith.constant 0 : index
    %26 = vector.load %arg8[%c0_13, %c0_14, %c0_15] : memref<1x1x64xf32, #tpu.memory_space<vmem>>, vector<1x1x64xf32>
    %27 = vector.shape_cast %26 : vector<1x1x64xf32> to vector<1x64xf32>
    %28 = vector.shape_cast %25 : vector<1x64xf32> to vector<1x1x64xf32>
    tpu.vector_store %arg8[%c0_13, %c0_14, %c0_15], %28 {strides = array<i32>} : memref<1x1x64xf32, #tpu.memory_space<vmem>>, vector<1x1x64xf32>,
    %29 = arith.mulf %23, %11 : vector<80x64xf32>
    %cst_16 = arith.constant dense<0.000000e+00> : vector<64xf32>
    %30 = vector.multi_reduction <add>, %29, %cst_16 [0] : vector<80x64xf32> to vector<64xf32>
    %31 = vector.shape_cast %30 : vector<64xf32> to vector<1x64xf32>
    %c0_17 = arith.constant 0 : index
    %c0_18 = arith.constant 0 : index
    %c0_19 = arith.constant 0 : index
    %32 = vector.load %arg9[%c0_17, %c0_18, %c0_19] : memref<1x1x64xf32, #tpu.memory_space<vmem>>, vector<1x1x64xf32>
    %33 = vector.shape_cast %32 : vector<1x1x64xf32> to vector<1x64xf32>
    %34 = vector.shape_cast %31 : vector<1x64xf32> to vector<1x1x64xf32>
    tpu.vector_store %arg9[%c0_17, %c0_18, %c0_19], %34 {strides = array<i32>} : memref<1x1x64xf32, #tpu.memory_space<vmem>>, vector<1x1x64xf32>,
    return
  }
  func.func @transform_0(%arg0: i32, %arg1: memref<1xi32, #tpu.memory_space<smem>>) -> (i32, i32) {
    %c0_i32 = arith.constant 0 : i32
    %c0_i32_0 = arith.constant 0 : i32
    return %arg0, %c0_i32 : i32, i32
  }
  func.func @transform_1(%arg0: i32, %arg1: memref<1xi32, #tpu.memory_space<smem>>) -> (i32, i32) {
    %c0_i32 = arith.constant 0 : i32
    %c0_i32_0 = arith.constant 0 : i32
    %c0_i32_1 = arith.constant 0 : i32
    return %c0_i32, %c0_i32_0 : i32, i32
  }
  func.func @transform_2(%arg0: i32, %arg1: memref<1xi32, #tpu.memory_space<smem>>) -> (i32, i32) {
    %c0_i32 = arith.constant 0 : i32
    %c0_i32_0 = arith.constant 0 : i32
    %c0_i32_1 = arith.constant 0 : i32
    return %c0_i32, %c0_i32_0 : i32, i32
  }
  func.func @transform_3(%arg0: i32, %arg1: memref<1xi32, #tpu.memory_space<smem>>) -> (i32, i32) {
    %c0_i32 = arith.constant 0 : i32
    %c0_i32_0 = arith.constant 0 : i32
    %c0_i32_1 = arith.constant 0 : i32
    return %c0_i32, %c0_i32_0 : i32, i32
  }
  func.func @transform_4(%arg0: i32, %arg1: memref<1xi32, #tpu.memory_space<smem>>) -> (i32, i32) {
    %c0_i32 = arith.constant 0 : i32
    %c0_i32_0 = arith.constant 0 : i32
    %c0_i32_1 = arith.constant 0 : i32
    return %c0_i32, %c0_i32_0 : i32, i32
  }
  func.func @transform_5(%arg0: i32, %arg1: memref<1xi32, #tpu.memory_space<smem>>) -> (i32, i32) {
    %c0_i32 = arith.constant 0 : i32
    %c0_i32_0 = arith.constant 0 : i32
    return %arg0, %c0_i32 : i32, i32
  }
  func.func @transform_6(%arg0: i32, %arg1: memref<1xi32, #tpu.memory_space<smem>>) -> (i32, i32, i32) {
    %c0_i32 = arith.constant 0 : i32
    %c0_i32_0 = arith.constant 0 : i32
    %c0_i32_1 = arith.constant 0 : i32
    return %arg0, %c0_i32, %c0_i32_0 : i32, i32, i32
  }
  func.func @transform_7(%arg0: i32, %arg1: memref<1xi32, #tpu.memory_space<smem>>) -> (i32, i32, i32) {
    %c0_i32 = arith.constant 0 : i32
    %c0_i32_0 = arith.constant 0 : i32
    %c0_i32_1 = arith.constant 0 : i32
    return %arg0, %c0_i32, %c0_i32_0 : i32, i32, i32
  }
}

</mosaic_0001>

<llo_original>
// kernel: tpu_custom_call.1
$region0: #{tpu_custom_call.1}
  #allocation0 [shape = 'u32[]', space=smem, size = 0x4, offset = 0x4, fixed_abs, tag = 'smem constant byte address 0x4 - core index']
  #allocation1 [shape = 'u32[144,128]{1,0:T(1,128)}', space=vmem, size = 0x12000, scoped, tag = 'internal scratch']
  #allocation2 [shape = 's32[1]{0}', space=sflag, size = 0x4, scoped, tag = 'scoped memory for tpu_custom_call.1']
  #allocation3 [shape = 's32[1]{0:T(128)S(6)}', space=smem, size = 0x200, scoped, tag = 'prefetched SMEM operand 0']
  %s0 = inlined_call_operand.<no memory space> [shape: s32[1], index: 0, kind: input, shape index: {}]
  %s1 = inlined_call_operand.vmem [shape: f32[80,8], index: 1, kind: input, shape index: {}]
  %s2 = inlined_call_operand.vmem [shape: f32[1,8], index: 2, kind: input, shape index: {}]
  %s3 = inlined_call_operand.vmem [shape: f32[1,8], index: 3, kind: input, shape index: {}]
  %s4 = inlined_call_operand.vmem [shape: f32[8,64], index: 4, kind: input, shape index: {}]
  %s5 = inlined_call_operand.vmem [shape: f32[1,64], index: 5, kind: input, shape index: {}]
  %s6 = inlined_call_operand.vmem [shape: f32[80,64], index: 6, kind: output, shape index: {0}]
  %s7 = inlined_call_operand.hbm [shape: f32[1,1,64], index: 7, kind: output, shape index: {1}]
  %s8 = inlined_call_operand.hbm [shape: f32[1,1,64], index: 8, kind: output, shape index: {2}]
  %9 = xla_tuple %s6, %s7, %s8
  %s10 = sld [smem:[#allocation0]]
  $region46: #{tpu_custom_call.1} parent=0
    _
  %s12 = ssub.s32 1, %s10
  %s13 = scalar_select 0, %s12, %s10
  %14 = sst [smem:[#allocation3]] %s0
  $region1: #{tpu_custom_call.1} parent=0
    #allocation4 [shape = 'u8[512]{0}', space=vmem, size = 0x400, scoped, tag = 'output window, operand 1, single buffered']
    #allocation5 [shape = 's32[1]{0}', space=sflag, size = 0x4, scoped, tag = 'scoped memory for tpu_custom_call.1']
    #allocation6 [shape = 'u8[512]{0}', space=vmem, size = 0x400, scoped, tag = 'output window, operand 2, single buffered']
    #allocation7 [shape = 's32[1]{0}', space=sflag, size = 0x4, scoped, tag = 'scoped memory for tpu_custom_call.1']
    %15 = vsyncpa [#allocation5], 0
    %16 = vsyncpa [#allocation7], 0
    // Predicated region
    $region2: #{tpu_custom_call.1} parent=1 // pred_check
      _
    $region3: #{tpu_custom_call.1} parent=1 // pred_check_branch
      %18 = sbr.rel (0) target = $region5
    $region4: #{tpu_custom_call.1} parent=1 // pred_region
      _
    $region5: #{tpu_custom_call.1} parent=1 // pred_fallthru
      _
    // Predicated region
    $region6: #{tpu_custom_call.1} parent=1 // pred_check
      _
    $region7: #{tpu_custom_call.1} parent=1 // pred_check_branch
      %20 = sbr.rel (0) target = $region9
    $region8: #{tpu_custom_call.1} parent=1 // pred_region
      _
    $region9: #{tpu_custom_call.1} parent=1 // pred_fallthru
      _
    // Predicated region
    $region10: #{tpu_custom_call.1} parent=1 // pred_check
      _
    $region11: #{tpu_custom_call.1} parent=1 // pred_check_branch
      %22 = sbr.rel (0) target = $region13
    $region12: #{tpu_custom_call.1} parent=1 // pred_region
      _
    $region13: #{tpu_custom_call.1} parent=1 // pred_fallthru
      _
    // Predicated region
    $region14: #{tpu_custom_call.1} parent=1 // pred_check
      _
    $region15: #{tpu_custom_call.1} parent=1 // pred_check_branch
      %24 = sbr.rel (0) target = $region17
    $region16: #{tpu_custom_call.1} parent=1 // pred_region
      _
    $region17: #{tpu_custom_call.1} parent=1 // pred_fallthru
      _
    // Predicated region
    $region18: #{tpu_custom_call.1} parent=1 // pred_check
      _
    $region19: #{tpu_custom_call.1} parent=1 // pred_check_branch
      %26 = sbr.rel (0) target = $region21
    $region20: #{tpu_custom_call.1} parent=1 // pred_region
      _
    $region21: #{tpu_custom_call.1} parent=1 // pred_fallthru
      _
    %v27 = vld [vmem:[%s1] sm:$0xff]
    %v28 = vld [vmem:[%s1 + $0x8] sm:$0xff]
    %v29 = vld [vmem:[%s1 + $0x10] sm:$0xff]
    %v30 = vld [vmem:[%s1 + $0x18] sm:$0xff]
    %v31 = vld [vmem:[%s1 + $0x20] sm:$0xff]
    %v32 = vld [vmem:[%s1 + $0x28] sm:$0xff]
    %v33 = vld [vmem:[%s1 + $0x30] sm:$0xff]
    %v34 = vld [vmem:[%s1 + $0x38] sm:$0xff]
    %v35 = vld [vmem:[%s1 + $0x40] sm:$0xff]
    %v36 = vld [vmem:[%s1 + $0x48] sm:$0xff]
    %v37 = vld [vmem:[%s2] sm:$0x1]
    %v39 = vlaneseq
    %v40 = vshrl.u32 %v39, 7
    %v41 = vsub.s32 0, %v40
    %v42 = vrot.slane %v37, %v41
    %v44 = vmul.f32 %v27, %v42
    %v45 = vmul.f32 %v28, %v42
    %v46 = vmul.f32 %v29, %v42
    %v47 = vmul.f32 %v30, %v42
    %v48 = vmul.f32 %v31, %v42
    %v49 = vmul.f32 %v32, %v42
    %v50 = vmul.f32 %v33, %v42
    %v51 = vmul.f32 %v34, %v42
    %v52 = vmul.f32 %v35, %v42
    %v53 = vmul.f32 %v36, %v42
    %v54 = vld [vmem:[%s3] sm:$0x1]
    %v56 = vlaneseq
    %v57 = vshrl.u32 %v56, 7
    %v58 = vsub.s32 0, %v57
    %v59 = vrot.slane %v54, %v58
    %v61 = vadd.f32 %v44, %v59
    %v62 = vadd.f32 %v45, %v59
    %v63 = vadd.f32 %v46, %v59
    %v64 = vadd.f32 %v47, %v59
    %v65 = vadd.f32 %v48, %v59
    %v66 = vadd.f32 %v49, %v59
    %v67 = vadd.f32 %v50, %v59
    %v68 = vadd.f32 %v51, %v59
    %v69 = vadd.f32 %v52, %v59
    %v70 = vadd.f32 %v53, %v59
    %v71 = vld [vmem:[%s4] sm:$0xff]
    %v72 = vld [vmem:[%s5] sm:$0x1]
    %v74 = vlaneseq
    %v75 = vshrl.u32 %v74, 7
    %v76 = vsub.s32 0, %v75
    %v77 = vrot.slane %v72, %v76
    %vm79 = vcmask 64512
    %v81 = vsel %vm79, %v61, 0
    %v84 = vsel %vm79, %v62, 0
    %v87 = vsel %vm79, %v63, 0
    %v90 = vsel %vm79, %v64, 0
    %v93 = vsel %vm79, %v65, 0
    %v96 = vsel %vm79, %v66, 0
    %v99 = vsel %vm79, %v67, 0
    %v102 = vsel %vm79, %v68, 0
    %v105 = vsel %vm79, %v69, 0
    %v108 = vsel %vm79, %v70, 0
    %110 = vmatprep.subr.mxu0 0.0
    %111 = vmatpush1.msra.mxu0 %v71
    %112 = vmatprep.subr.mxu0 0.0
    %113 = vmatpush1.msra.mxu0 0.0
    %114 = vmatprep.subr.mxu0 0.0
    %115 = vmatpush1.msra.mxu0 0.0
    %116 = vmatprep.subr.mxu0 0.0
    %117 = vmatpush1.msra.mxu0 0.0
    %118 = vmatprep.subr.mxu0 0.0
    %119 = vmatpush1.msra.mxu0 0.0
    %120 = vmatprep.subr.mxu0 0.0
    %121 = vmatpush1.msra.mxu0 0.0
    %122 = vmatprep.subr.mxu0 0.0
    %123 = vmatpush1.msra.mxu0 0.0
    %124 = vmatprep.subr.mxu0 0.0
    %125 = vmatpush1.msra.mxu0 0.0
    %126 = vmatprep.subr.mxu0 0.0
    %127 = vmatpush1.msra.mxu0 0.0
    %128 = vmatprep.subr.mxu0 0.0
    %129 = vmatpush1.msra.mxu0 0.0
    %130 = vmatprep.subr.mxu0 0.0
    %131 = vmatpush1.msra.mxu0 0.0
    %132 = vmatprep.subr.mxu0 0.0
    %133 = vmatpush1.msra.mxu0 0.0
    %134 = vmatprep.subr.mxu0 0.0
    %135 = vmatpush1.msra.mxu0 0.0
    %136 = vmatprep.subr.mxu0 0.0
    %137 = vmatpush1.msra.mxu0 0.0
    %138 = vmatprep.subr.mxu0 0.0
    %139 = vmatpush1.msra.mxu0 0.0
    %140 = vmatprep.subr.mxu0 0.0
    %141 = vmatpush1.msra.mxu0 0.0
    %142 = vmatprep.subr.mxu0 0.0
    %143 = vmatpush1.msra.mxu0 0.0
    %144 = vmatprep.subr.mxu0 0.0
    %145 = vmatpush1.msra.mxu0 0.0
    %146 = vmatprep.subr.mxu0 0.0
    %147 = vmatpush1.msra.mxu0 0.0
    %148 = vmatprep.subr.mxu0 0.0
    %149 = vmatpush1.msra.mxu0 0.0
    %150 = vmatprep.subr.mxu0 0.0
    %151 = vmatpush1.msra.mxu0 0.0
    %152 = vmatprep.subr.mxu0 0.0
    %153 = vmatpush1.msra.mxu0 0.0
    %154 = vmatprep.subr.mxu0 0.0
    %155 = vmatpush1.msra.mxu0 0.0
    %156 = vmatprep.subr.mxu0 0.0
    %157 = vmatpush1.msra.mxu0 0.0
    %158 = vmatprep.subr.mxu0 0.0
    %159 = vmatpush1.msra.mxu0 0.0
    %160 = vmatprep.subr.mxu0 0.0
    %161 = vmatpush1.msra.mxu0 0.0
    %162 = vmatprep.subr.mxu0 0.0
    %163 = vmatpush1.msra.mxu0 0.0
    %164 = vmatprep.subr.mxu0 0.0
    %165 = vmatpush1.msra.mxu0 0.0
    %166 = vmatprep.subr.mxu0 0.0
    %167 = vmatpush1.msra.mxu0 0.0
    %168 = vmatprep.subr.mxu0 0.0
    %169 = vmatpush1.msra.mxu0 0.0
    %170 = vmatprep.subr.mxu0 0.0
    %171 = vmatpush1.msra.mxu0 0.0
    %172 = vmatprep.subr.mxu0 0.0
    %173 = vmatpush1.msra.mxu0 0.0
    %174 = vmatprep.mubr.f32.mxu0 0.0
    %175 = vmatmul.mubr.f32.gmra.mrb[0].mxu0 %v81
    %v176 = vpop.f32.mrb[0].mxu0
    %v177 = vadd.f32 %v77, %v176
    %v178 = vpop.f32.mrb[0].mxu0
    %179 = vmatprep.mubr.f32.mxu0 0.0
    %180 = vmatmul.mubr.f32.gmra.mrb[0].mxu0 %v84
    %v181 = vpop.f32.mrb[0].mxu0
    %v182 = vadd.f32 %v77, %v181
    %v183 = vpop.f32.mrb[0].mxu0
    %184 = vmatprep.mubr.f32.mxu0 0.0
    %185 = vmatmul.mubr.f32.gmra.mrb[0].mxu0 %v87
    %v186 = vpop.f32.mrb[0].mxu0
    %v187 = vadd.f32 %v77, %v186
    %v188 = vpop.f32.mrb[0].mxu0
    %189 = vmatprep.mubr.f32.mxu0 0.0
    %190 = vmatmul.mubr.f32.gmra.mrb[0].mxu0 %v90
    %v191 = vpop.f32.mrb[0].mxu0
    %v192 = vadd.f32 %v77, %v191
    %v193 = vpop.f32.mrb[0].mxu0
    %194 = vmatprep.mubr.f32.mxu0 0.0
    %195 = vmatmul.mubr.f32.gmra.mrb[0].mxu0 %v93
    %v196 = vpop.f32.mrb[0].mxu0
    %v197 = vadd.f32 %v77, %v196
    %v198 = vpop.f32.mrb[0].mxu0
    %199 = vmatprep.mubr.f32.mxu0 0.0
    %200 = vmatmul.mubr.f32.gmra.mrb[0].mxu0 %v96
    %v201 = vpop.f32.mrb[0].mxu0
    %v202 = vadd.f32 %v77, %v201
    %v203 = vpop.f32.mrb[0].mxu0
    %204 = vmatprep.mubr.f32.mxu0 0.0
    %205 = vmatmul.mubr.f32.gmra.mrb[0].mxu0 %v99
    %v206 = vpop.f32.mrb[0].mxu0
    %v207 = vadd.f32 %v77, %v206
    %v208 = vpop.f32.mrb[0].mxu0
    %209 = vmatprep.mubr.f32.mxu0 0.0
    %210 = vmatmul.mubr.f32.gmra.mrb[0].mxu0 %v102
    %v211 = vpop.f32.mrb[0].mxu0
    %v212 = vadd.f32 %v77, %v211
    %v213 = vpop.f32.mrb[0].mxu0
    %214 = vmatprep.mubr.f32.mxu0 0.0
    %215 = vmatmul.mubr.f32.gmra.mrb[0].mxu0 %v105
    %v216 = vpop.f32.mrb[0].mxu0
    %v217 = vadd.f32 %v77, %v216
    %v218 = vpop.f32.mrb[0].mxu0
    %219 = vmatprep.mubr.f32.mxu0 0.0
    %220 = vmatmul.mubr.f32.gmra.mrb[0].mxu0 %v108
    %v221 = vpop.f32.mrb[0].mxu0
    %v222 = vadd.f32 %v77, %v221
    %v223 = vpop.f32.mrb[0].mxu0
    %224 = vdwg.mxu0
    %vm225 = vcmask 523264
    %226 = vst.msk [vmem:[%s6] sm:$0xff] %vm225, %v177
    %227 = vst.msk [vmem:[%s6 + $0x8] sm:$0xff] %vm225, %v182
    %228 = vst.msk [vmem:[%s6 + $0x10] sm:$0xff] %vm225, %v187
    %229 = vst.msk [vmem:[%s6 + $0x18] sm:$0xff] %vm225, %v192
    %230 = vst.msk [vmem:[%s6 + $0x20] sm:$0xff] %vm225, %v197
    %231 = vst.msk [vmem:[%s6 + $0x28] sm:$0xff] %vm225, %v202
    %232 = vst.msk [vmem:[%s6 + $0x30] sm:$0xff] %vm225, %v207
    %233 = vst.msk [vmem:[%s6 + $0x38] sm:$0xff] %vm225, %v212
    %234 = vst.msk [vmem:[%s6 + $0x40] sm:$0xff] %vm225, %v217
    %235 = vst.msk [vmem:[%s6 + $0x48] sm:$0xff] %vm225, %v222
    %s236 = smul.u32 0, 80
    %v237 = vlaneseq
    %v238 = vshrl.u32 %v237, 7
    %v239 = vadd.s32 %v238, 8
    %v240 = vadd.s32 %v238, 16
    %v241 = vadd.s32 %v238, 24
    %v242 = vadd.s32 %v238, 32
    %v243 = vadd.s32 %v238, 40
    %v244 = vadd.s32 %v238, 48
    %v245 = vadd.s32 %v238, 56
    %v246 = vadd.s32 %v238, 64
    %v247 = vadd.s32 %v238, 72
    %v248 = vstv %s236
    %v249 = vadd.s32 %v248, %v238
    %v250 = vadd.s32 %v248, %v239
    %v251 = vadd.s32 %v248, %v240
    %v252 = vadd.s32 %v248, %v241
    %v253 = vadd.s32 %v248, %v242
    %v254 = vadd.s32 %v248, %v243
    %v255 = vadd.s32 %v248, %v244
    %v256 = vadd.s32 %v248, %v245
    %v257 = vadd.s32 %v248, %v246
    %v258 = vadd.s32 %v248, %v247
    %s259 = sld [smem:[#allocation3]]
    %v260 = vstv %s259
    %vm261 = vcmp.lt.s32.totalorder %v249, %v260
    %vm262 = vcmp.lt.s32.totalorder %v250, %v260
    %vm263 = vcmp.lt.s32.totalorder %v251, %v260
    %vm264 = vcmp.lt.s32.totalorder %v252, %v260
    %vm265 = vcmp.lt.s32.totalorder %v253, %v260
    %vm266 = vcmp.lt.s32.totalorder %v254, %v260
    %vm267 = vcmp.lt.s32.totalorder %v255, %v260
    %vm268 = vcmp.lt.s32.totalorder %v256, %v260
    %vm269 = vcmp.lt.s32.totalorder %v257, %v260
    %vm270 = vcmp.lt.s32.totalorder %v258, %v260
    %v271 = vsel %vm261, 1, 0
    %v272 = vsel %vm262, 1, 0
    %v273 = vsel %vm263, 1, 0
    %v274 = vsel %vm264, 1, 0
    %v275 = vsel %vm265, 1, 0
    %v276 = vsel %vm266, 1, 0
    %v277 = vsel %vm267, 1, 0
    %v278 = vsel %vm268, 1, 0
    %v279 = vsel %vm269, 1, 0
    %v280 = vsel %vm270, 1, 0
    %v281 = vcvt.s32.f32 %v271
    %v282 = vcvt.s32.f32 %v272
    %v283 = vcvt.s32.f32 %v273
    %v284 = vcvt.s32.f32 %v274
    %v285 = vcvt.s32.f32 %v275
    %v286 = vcvt.s32.f32 %v276
    %v287 = vcvt.s32.f32 %v277
    %v288 = vcvt.s32.f32 %v278
    %v289 = vcvt.s32.f32 %v279
    %v290 = vcvt.s32.f32 %v280
    %v291 = vmul.f32 %v177, %v281
    %v292 = vmul.f32 %v182, %v282
    %v293 = vmul.f32 %v187, %v283
    %v294 = vmul.f32 %v192, %v284
    %v295 = vmul.f32 %v197, %v285
    %v296 = vmul.f32 %v202, %v286
    %v297 = vmul.f32 %v207, %v287
    %v298 = vmul.f32 %v212, %v288
    %v299 = vmul.f32 %v217, %v289
    %v300 = vmul.f32 %v222, %v290
    %v301 = vsel %vm225, %v291, 0.0
    %v302 = vsel %vm225, %v292, 0.0
    %v303 = vadd.f32 %v301, %v302
    %v304 = vsel %vm225, %v293, 0.0
    %v305 = vadd.f32 %v303, %v304
    %v306 = vsel %vm225, %v294, 0.0
    %v307 = vadd.f32 %v305, %v306
    %v308 = vsel %vm225, %v295, 0.0
    %v309 = vadd.f32 %v307, %v308
    %v310 = vsel %vm225, %v296, 0.0
    %v311 = vadd.f32 %v309, %v310
    %v312 = vsel %vm225, %v297, 0.0
    %v313 = vadd.f32 %v311, %v312
    %v314 = vsel %vm225, %v298, 0.0
    %v315 = vadd.f32 %v313, %v314
    %v316 = vsel %vm225, %v299, 0.0
    %v317 = vadd.f32 %v315, %v316
    %v318 = vsel %vm225, %v300, 0.0
    %v319 = vadd.f32 %v317, %v318
    %v320 = vrot.slane %v319, 4
    %v321 = vadd.f32 %v319, %v320
    %v322 = vrot.slane %v321, 2
    %v323 = vadd.f32 %v321, %v322
    %v324 = vrot.slane %v323, 1
    %v325 = vadd.f32 %v323, %v324
    %vm326 = vcmask 516096
    %327 = vst.msk [vmem:[#allocation4] sm:$0x1] %vm326, %v325
    %v328 = vmul.f32 %v291, %v177
    %v329 = vmul.f32 %v292, %v182
    %v330 = vmul.f32 %v293, %v187
    %v331 = vmul.f32 %v294, %v192
    %v332 = vmul.f32 %v295, %v197
    %v333 = vmul.f32 %v296, %v202
    %v334 = vmul.f32 %v297, %v207
    %v335 = vmul.f32 %v298, %v212
    %v336 = vmul.f32 %v299, %v217
    %v337 = vmul.f32 %v300, %v222
    %v338 = vsel %vm225, %v328, 0.0
    %v339 = vsel %vm225, %v329, 0.0
    %v340 = vadd.f32 %v338, %v339
    %v341 = vsel %vm225, %v330, 0.0
    %v342 = vadd.f32 %v340, %v341
    %v343 = vsel %vm225, %v331, 0.0
    %v344 = vadd.f32 %v342, %v343
    %v345 = vsel %vm225, %v332, 0.0
    %v346 = vadd.f32 %v344, %v345
    %v347 = vsel %vm225, %v333, 0.0
    %v348 = vadd.f32 %v346, %v347
    %v349 = vsel %vm225, %v334, 0.0
    %v350 = vadd.f32 %v348, %v349
    %v351 = vsel %vm225, %v335, 0.0
    %v352 = vadd.f32 %v350, %v351
    %v353 = vsel %vm225, %v336, 0.0
    %v354 = vadd.f32 %v352, %v353
    %v355 = vsel %vm225, %v337, 0.0
    %v356 = vadd.f32 %v354, %v355
    %v357 = vrot.slane %v356, 4
    %v358 = vadd.f32 %v356, %v357
    %v359 = vrot.slane %v358, 2
    %v360 = vadd.f32 %v358, %v359
    %v361 = vrot.slane %v360, 1
    %v362 = vadd.f32 %v360, %v361
    %363 = vst.msk [vmem:[#allocation6] sm:$0x1] %vm326, %v362
    // Predicated region
    $region22: #{tpu_custom_call.1} parent=1 // pred_check
      _
    $region23: #{tpu_custom_call.1} parent=1 // pred_check_branch
      %365 = sbr.rel (0) target = $region25
    $region24: #{tpu_custom_call.1} parent=1 // pred_region
      _
    $region25: #{tpu_custom_call.1} parent=1 // pred_fallthru
      _
    // Predicated region
    $region26: #{tpu_custom_call.1} parent=1 // pred_check
      _
    $region27: #{tpu_custom_call.1} parent=1 // pred_check_branch
      %367 = sbr.rel (0) target = $region29
    $region28: #{tpu_custom_call.1} parent=1 // pred_region
      %s369 = ssub.s32 16, 16
      %370 = vsyncadd [#allocation5], %s369
      %s372 = sshll.u32 [#allocation4], 4
      %s373 = int_to_ptr.vmem [resolvable:$true] %s372
      %375 = dma.vmem_to_hbm [thread:$0]  %s373, 16, %s7, [#allocation5]
    $region29: #{tpu_custom_call.1} parent=1 // pred_fallthru
      _
    // Predicated region
    $region30: #{tpu_custom_call.1} parent=1 // pred_check
      _
    $region31: #{tpu_custom_call.1} parent=1 // pred_check_branch
      %377 = sbr.rel (0) target = $region33
    $region32: #{tpu_custom_call.1} parent=1 // pred_region
      %s379 = ssub.s32 16, 16
      %380 = vsyncadd [#allocation7], %s379
      %s382 = sshll.u32 [#allocation6], 4
      %s383 = int_to_ptr.vmem [resolvable:$true] %s382
      %385 = dma.vmem_to_hbm [thread:$0]  %s383, 16, %s8, [#allocation7]
    $region33: #{tpu_custom_call.1} parent=1 // pred_fallthru
      _
    // Predicated region
    $region34: #{tpu_custom_call.1} parent=1 // pred_check
      _
    $region35: #{tpu_custom_call.1} parent=1 // pred_check_branch
      %387 = sbr.rel (0) target = $region37
    $region36: #{tpu_custom_call.1} parent=1 // pred_region
      _
    $region37: #{tpu_custom_call.1} parent=1 // pred_fallthru
      _
    // Predicated region
    $region38: #{tpu_custom_call.1} parent=1 // pred_check
      _
    $region39: #{tpu_custom_call.1} parent=1 // pred_check_branch
      %389 = sbr.rel (0) target = $region41
    $region40: #{tpu_custom_call.1} parent=1 // pred_region
      %390 = dma.done [#allocation5], 16
    $region41: #{tpu_custom_call.1} parent=1 // pred_fallthru
      _
    // Predicated region
    $region42: #{tpu_custom_call.1} parent=1 // pred_check
      _
    $region43: #{tpu_custom_call.1} parent=1 // pred_check_branch
      %392 = sbr.rel (0) target = $region45
    $region44: #{tpu_custom_call.1} parent=1 // pred_region
      %393 = dma.done [#allocation7], 16
    $region45: #{tpu_custom_call.1} parent=1 // pred_fallthru
      _
    %394 = vsyncpa [#allocation5], 1
    %395 = vsyncpa [#allocation7], 1

</llo_original>
